<compile_context>
chip_gen: v7x
topology: tpu7x:2x2x1
jax: 0.10.0
libtpu: 0.0.40
codegen_flags: <defaults>
</compile_context>

<pallas_src>
import functools
import math

import jax
import jax.numpy as jnp
from jax import lax
from jax.experimental import pallas as pl
from jax.experimental.pallas import tpu as pltpu


# ----------------------------------------------------------------------------
# Helpers
# ----------------------------------------------------------------------------

def _mm(a, b):
    # bf16 MXU operands, f32 accumulation
    return jnp.dot(a.astype(jnp.bfloat16), b.astype(jnp.bfloat16),
                   preferred_element_type=jnp.float32)


def _layernorm(x, g, b, eps=1e-5):
    mu = jnp.mean(x, axis=-1, keepdims=True)
    var = jnp.mean((x - mu) ** 2, axis=-1, keepdims=True)
    return (x - mu) * lax.rsqrt(var + eps) * g + b


def _vmem_limit_bytes():
    """Generation-aware VMEM budget (~56 MiB on v7x, 100 MiB on v5e/v6e)."""
    try:
        cap = int(pltpu.get_tpu_info().vmem_capacity_bytes)
    except Exception:
        cap = 64 * 1024 * 1024
    return max(32 * 1024 * 1024, min(cap - 8 * 1024 * 1024, 100 * 1024 * 1024))


def _pick_s_tile(S, vmem_bytes):
    cap = 2048 if vmem_bytes > (64 << 20) else 1024
    if S <= cap:
        return S
    return cap  # multiple of 8; ragged tail handled by Pallas block clipping


def _pick_q_tile(N, cap=128):
    if N <= cap:
        return N
    for t in range(cap - (cap % 8), 7, -8):
        if N % t == 0:
            return t
    return N


# Weights/biases have constant index maps: no point double-buffering them.
_SINGLE_BUF = pl.Buffered(1)


# ----------------------------------------------------------------------------
# Kernel 1: value projection over the full memory, tiled along S
# ----------------------------------------------------------------------------

def _value_proj_kernel(mem_ref, w_ref, b_ref, o_ref):
    x = mem_ref[...]                                            # (ts, C) bf16
    o_ref[...] = (_mm(x, w_ref[...]) + b_ref[...].astype(jnp.float32)
                  ).astype(o_ref.dtype)


def value_projection(memory_bf16, w, b):
    """(B, S, C_enc) @ (C_enc, D) + b -> bf16 (B, S, D), tiled along S."""
    B, S, C = memory_bf16.shape
    D = w.shape[1]
    vlimit = _vmem_limit_bytes()
    ts = _pick_s_tile(S, vlimit)
    return pl.pallas_call(
        _value_proj_kernel,
        out_shape=jax.ShapeDtypeStruct((B, S, D), jnp.bfloat16),
        grid=(B, pl.cdiv(S, ts)),
        in_specs=[pl.BlockSpec((None, ts, C), lambda bi, si: (bi, si, 0)),
                  pl.BlockSpec((C, D), lambda bi, si: (0, 0),
                               pipeline_mode=_SINGLE_BUF),
                  pl.BlockSpec((1, D), lambda bi, si: (0, 0),
                               pipeline_mode=_SINGLE_BUF)],
        out_specs=pl.BlockSpec((None, ts, D), lambda bi, si: (bi, si, 0)),
        compiler_params=pltpu.CompilerParams(
            dimension_semantics=("parallel", "parallel"),
            vmem_limit_bytes=vlimit),
    )(memory_bf16, w, b)


# ----------------------------------------------------------------------------
# Kernel 2: fused token path (self-attn + box-attn gather + FFN + 3x LN)
# ----------------------------------------------------------------------------

def _fused_decoder_kernel(idx_ref,                              # SMEM (B, N*P*4)
                          tgt_ref, qpos_ref, value_ref, wgt_ref,
                          wqk_ref, bqk_ref, wv_sa_ref, bv_sa_ref,
                          wo_sa_ref, bo_sa_ref, ln1_g_ref, ln1_b_ref,
                          wattn_ref, battn_ref, wo_box_ref, bo_box_ref,
                          ln2_g_ref, ln2_b_ref,
                          w1_ref, b1_ref, w2_ref, b2_ref,
                          ln3_g_ref, ln3_b_ref,
                          o_ref,                                # (tq, D)
                          samp_ref,                             # VMEM (tq*P, D) f32
                          *, nhead, npoints, q_tile):
    f32 = jnp.float32
    bf16 = jnp.bfloat16
    b = pl.program_id(0)
    qi = pl.program_id(1)

    N, D = tgt_ref.shape
    hd = D // nhead
    P = npoints
    tq = q_tile
    scale = 1.0 / math.sqrt(hd)

    q0 = qi * tq
    if tq % 8 == 0:
        q0 = pl.multiple_of(q0, 8)

    tgt_all = tgt_ref[...].astype(f32)                          # (N, D)
    qpos_all = qpos_ref[...].astype(f32)
    tgt_t = tgt_ref[pl.ds(q0, tq), :].astype(f32)               # (tq, D)
    qpos_t = qpos_ref[pl.ds(q0, tq), :].astype(f32)

    # ---------------- self-attention (nn.MultiheadAttention semantics) -------
    kin_all = tgt_all + qpos_all                                # q == k == tgt+pos
    qin_t = tgt_t + qpos_t
    wqk = wqk_ref[...]                                          # (D, 2D) bf16
    bqk = bqk_ref[...].astype(f32)
    K_all = _mm(kin_all, wqk[:, D:]) + bqk[:, D:]               # (N, D)
    Q_t = _mm(qin_t, wqk[:, :D]) + bqk[:, :D]                   # (tq, D)
    V_all = _mm(tgt_all, wv_sa_ref[...]) + bv_sa_ref[...].astype(f32)

    Qh = Q_t.reshape(tq, nhead, hd)
    Kh = K_all.reshape(N, nhead, hd)
    Vh = V_all.reshape(N, nhead, hd)

    s = jnp.einsum('qhc,khc->hqk', Qh.astype(bf16), Kh.astype(bf16),
                   preferred_element_type=f32) * scale          # (H, tq, N)
    s = s - jnp.max(s, axis=-1, keepdims=True)
    p = jnp.exp(s)
    p = p * pl.reciprocal(jnp.sum(p, axis=-1, keepdims=True), approx=True)
    ctx = jnp.einsum('hqk,khc->qhc', p.astype(bf16), Vh.astype(bf16),
                     preferred_element_type=f32)                # (tq, H, hd)
    sa_out = _mm(ctx.reshape(tq, D), wo_sa_ref[...]) + bo_sa_ref[...].astype(f32)

    x = _layernorm(tgt_t + sa_out, ln1_g_ref[...], ln1_b_ref[...])

    # ---------------- box attention: bilinear gather from resident value -----
    # 4 dynamic-slice row loads + VPU weighted sum per sample point (no dense
    # one-hot matmul, no (N*P, S) HBM traffic).
    def gather_body(r, carry):
        grow = qi * tq * P + r                                  # global sample row
        wrow = wgt_ref[pl.ds(grow, 1), :].astype(f32)           # (1, 4) bilinear w
        row = jnp.zeros((1, D), f32)
        for c in range(4):                                      # unrolled corners
            src = idx_ref[b, grow * 4 + c]                      # SMEM scalar index
            row = row + value_ref[pl.ds(src, 1), :].astype(f32) * wrow[:, c:c + 1]
        samp_ref[pl.ds(r, 1), :] = row
        return carry

    lax.fori_loop(0, tq * P, gather_body, 0)

    q2 = x + qpos_t
    logits = _mm(q2, wattn_ref[...]) + battn_ref[...].astype(f32)   # (tq, H*P)
    logits = logits.reshape(tq, nhead, P)
    logits = logits - jnp.max(logits, axis=-1, keepdims=True)
    aw = jnp.exp(logits)
    aw = aw * pl.reciprocal(jnp.sum(aw, axis=-1, keepdims=True), approx=True)

    sampled = samp_ref[...].reshape(tq, P, nhead, hd)               # f32
    aw_t = jnp.transpose(aw, (0, 2, 1))[:, :, :, None]              # (tq, P, H, 1)
    head_out = jnp.sum(sampled * aw_t, axis=1)                      # VPU reduction
    box_out = _mm(head_out.reshape(tq, D), wo_box_ref[...]) + bo_box_ref[...].astype(f32)

    x = _layernorm(x + box_out, ln2_g_ref[...], ln2_b_ref[...])

    # ---------------- FFN -----------------------------------------------------
    h1 = jnp.maximum(_mm(x, w1_ref[...]) + b1_ref[...].astype(f32), 0.0)
    ffn = _mm(h1, w2_ref[...]) + b2_ref[...].astype(f32)
    x = _layernorm(x + ffn, ln3_g_ref[...], ln3_b_ref[...])

    # At real model sizes D >= 128 so this store is lane-dense; toy D=32 masks.
    o_ref[...] = x.astype(o_ref.dtype)


def fused_token_path(params, tgt, query_pos, value, corner_idx, corner_wgt,
                     *, nhead):
    B, N, D = tgt.shape
    S = value.shape[1]
    HP = params["w_attn"].shape[1]
    assert HP % nhead == 0
    P = HP // nhead
    F = params["w1"].shape[1]
    assert corner_idx.shape == (B, N * P * 4)
    assert corner_wgt.shape == (B, N * P, 4)

    tq = _pick_q_tile(N)
    nqt = N // tq
    vlimit = _vmem_limit_bytes()

    kernel = functools.partial(_fused_decoder_kernel,
                               nhead=nhead, npoints=P, q_tile=tq)

    def batch_spec(n, d):
        return pl.BlockSpec((None, n, d), lambda b, qi, *_: (b, 0, 0))

    def qtile_spec(d):
        return pl.BlockSpec((None, tq, d), lambda b, qi, *_: (b, qi, 0))

    def const_spec(shape):
        nd = len(shape)
        return pl.BlockSpec(shape, lambda b, qi, *_: (0,) * nd,
                            pipeline_mode=_SINGLE_BUF)

    in_specs = [
        batch_spec(N, D),                    # tgt (full rows: needed for K/V)
        batch_spec(N, D),                    # query_pos
        batch_spec(S, D),                    # projected value (bf16, VMEM-resident)
        batch_spec(N * P, 4),                # bilinear corner weights
        const_spec((D, 2 * D)), const_spec((1, 2 * D)),      # wqk, bqk
        const_spec((D, D)), const_spec((1, D)),              # wv_sa, bv_sa
        const_spec((D, D)), const_spec((1, D)),              # wo_sa, bo_sa
        const_spec((1, D)), const_spec((1, D)),              # ln1
        const_spec((D, HP)), const_spec((1, HP)),            # w_attn, b_attn
        const_spec((D, D)), const_spec((1, D)),              # wo_box, bo_box
        const_spec((1, D)), const_spec((1, D)),              # ln2
        const_spec((D, F)), const_spec((1, F)),              # w1, b1
        const_spec((F, D)), const_spec((1, D)),              # w2, b2
        const_spec((1, D)), const_spec((1, D)),              # ln3
    ]

    grid_spec = pltpu.PrefetchScalarGridSpec(
        num_scalar_prefetch=1,               # corner indices -> SMEM
        grid=(B, nqt),
        in_specs=in_specs,
        out_specs=qtile_spec(D),
        scratch_shapes=[pltpu.VMEM((tq * P, D), jnp.float32)],
    )

    return pl.pallas_call(
        kernel,
        out_shape=jax.ShapeDtypeStruct((B, N, D), tgt.dtype),
        grid_spec=grid_spec,
        compiler_params=pltpu.CompilerParams(
            dimension_semantics=("parallel", "parallel"),
            vmem_limit_bytes=vlimit),
    )(corner_idx,
      tgt, query_pos, value, corner_wgt,
      params["wqk"], params["bqk"],
      params["wv_sa"], params["bv_sa"],
      params["wo_sa"], params["bo_sa"],
      params["ln1_g"], params["ln1_b"],
      params["w_attn"], params["b_attn"],
      params["wo_box"], params["bo_box"],
      params["ln2_g"], params["ln2_b"],
      params["w1"], params["b1"],
      params["w2"], params["b2"],
      params["ln3_g"], params["ln3_b"])


# ----------------------------------------------------------------------------
# Plain-JAX glue: bilinear corner indices + weights (elementwise only, NO gather)
# ----------------------------------------------------------------------------

def build_bilinear_corners(level_shapes, level_starts, valid_ratios,
                           ref_windows, *, kernel_size=2):
    """Returns int32 indices (B, N*P*4) and f32 weights (B, N*P, 4), P=nlevel*k*k."""
    B, N = ref_windows.shape[:2]
    kk = kernel_size * kernel_size

    offs = []
    for iy in range(kernel_size):
        for ix in range(kernel_size):
            offs.append(((iy + 0.5) / kernel_size - 0.5,
                         (ix + 0.5) / kernel_size - 0.5))
    offs = jnp.asarray(offs, jnp.float32)                      # (kk, 2) as (dy, dx)

    cx, cy, w, h = (ref_windows[..., i] for i in range(4))     # each (B, N)
    xs = cx[:, :, None] + offs[None, None, :, 1] * w[:, :, None]   # (B, N, kk)
    ys = cy[:, :, None] + offs[None, None, :, 0] * h[:, :, None]

    idx_levels, wgt_levels = [], []
    for l, (H, W) in enumerate(level_shapes):
        start = level_starts[l]
        vr_w = valid_ratios[:, l, 0][:, None, None]
        vr_h = valid_ratios[:, l, 1][:, None, None]
        x = xs * vr_w * W - 0.5
        y = ys * vr_h * H - 0.5
        x0 = jnp.floor(x)
        y0 = jnp.floor(y)
        lx = x - x0
        ly = y - y0
        c_idx, c_wgt = [], []
        for dx, dy, cw in ((0.0, 0.0, (1 - lx) * (1 - ly)),
                           (1.0, 0.0, lx * (1 - ly)),
                           (0.0, 1.0, (1 - lx) * ly),
                           (1.0, 1.0, lx * ly)):
            xi = x0 + dx
            yi = y0 + dy
            valid = ((xi >= 0) & (xi <= W - 1) & (yi >= 0) & (yi <= H - 1))
            xc = jnp.clip(xi, 0, W - 1).astype(jnp.int32)
            yc = jnp.clip(yi, 0, H - 1).astype(jnp.int32)
            c_idx.append(start + yc * W + xc)                  # (B, N, kk)
            c_wgt.append(cw * valid.astype(jnp.float32))       # zero-padding OOB
        idx_levels.append(jnp.stack(c_idx, axis=-1))           # (B, N, kk, 4)
        wgt_levels.append(jnp.stack(c_wgt, axis=-1))

    idx = jnp.stack(idx_levels, axis=2)                        # (B, N, nlevel, kk, 4)
    wgt = jnp.stack(wgt_levels, axis=2)
    P = len(level_shapes) * kk
    return (idx.reshape(B, N * P * 4).astype(jnp.int32),
            wgt.reshape(B, N * P, 4).astype(jnp.float32))


# ----------------------------------------------------------------------------
# Full decoder layer (forward_post, use_mask=False; dropout = identity in eval)
# ----------------------------------------------------------------------------

def box_transformer_decoder_layer(params, tgt, query_pos, memory, memory_shape,
                                  memory_mask, memory_start_index,
                                  memory_valid_ratios, ref_windows,
                                  *, nhead, kernel_size=2):
    # TODO(synk): memory_mask (key padding) is not applied to sampled features.
    value = value_projection(memory.astype(jnp.bfloat16),
                             params["w_value"], params["b_value"])
    corner_idx, corner_wgt = build_bilinear_corners(
        memory_shape, memory_start_index, memory_valid_ratios, ref_windows,
        kernel_size=kernel_size)
    out = fused_token_path(params, tgt, query_pos, value, corner_idx, corner_wgt,
                           nhead=nhead)
    return out, None   # roi is None when use_mask=False


# ----------------------------------------------------------------------------
# Deterministic parameter init (weight matrices in bf16, biases/LN in f32)
# ----------------------------------------------------------------------------

def init_params(key, enc_dim, dec_dim, nhead, nlevel, dff, kernel_size=2):
    P = nlevel * kernel_size * kernel_size
    ks = iter(jax.random.split(key, 12))

    def w(shape, scale=0.02):
        return (jax.random.normal(next(ks), shape, jnp.float32) * scale
                ).astype(jnp.bfloat16)

    def zeros(shape):
        return jnp.zeros(shape, jnp.float32)

    def ones(shape):
        return jnp.ones(shape, jnp.float32)

    wq = w((dec_dim, dec_dim))
    wk = w((dec_dim, dec_dim))
    return {
        # self-attention (stored transposed: x @ W); Q|K projections fused
        "wqk": jnp.concatenate([wq, wk], axis=1),
        "bqk": zeros((1, 2 * dec_dim)),
        "wv_sa": w((dec_dim, dec_dim)), "bv_sa": zeros((1, dec_dim)),
        "wo_sa": w((dec_dim, dec_dim)), "bo_sa": zeros((1, dec_dim)),
        # box attention
        "w_value": w((enc_dim, dec_dim)), "b_value": zeros((1, dec_dim)),
        "w_attn": w((dec_dim, nhead * P)), "b_attn": zeros((1, nhead * P)),
        "wo_box": w((dec_dim, dec_dim)), "bo_box": zeros((1, dec_dim)),
        # FFN
        "w1": w((dec_dim, dff)), "b1": zeros((1, dff)),
        "w2": w((dff, dec_dim)), "b2": zeros((1, dec_dim)),
        # LayerNorms
        "ln1_g": ones((1, dec_dim)), "ln1_b": zeros((1, dec_dim)),
        "ln2_g": ones((1, dec_dim)), "ln2_b": zeros((1, dec_dim)),
        "ln3_g": ones((1, dec_dim)), "ln3_b": zeros((1, dec_dim)),
    }


# ----------------------------------------------------------------------------
# Example run
# ----------------------------------------------------------------------------

if __name__ == "__main__":
    B, N = 2, 8
    ENC_DIM = DEC_DIM = 32
    NHEAD = 4
    NLEVEL = 2
    DFF = 64
    KSZ = 2

    level_shapes = [(8, 8), (4, 4)]
    level_starts = [0, 64]
    S = sum(h * w for h, w in level_shapes)   # 80

    key = jax.random.PRNGKey(0)
    kp, kt, kq, km, kr1, kr2 = jax.random.split(key, 6)

    params = init_params(kp, ENC_DIM, DEC_DIM, NHEAD, NLEVEL, DFF, KSZ)

    tgt = jax.random.normal(kt, (B, N, DEC_DIM), jnp.float32)
    query_pos = jax.random.normal(kq, (B, N, DEC_DIM), jnp.float32)
    memory = jax.random.normal(km, (B, S, ENC_DIM), jnp.float32)
    memory_valid_ratios = jnp.ones((B, NLEVEL, 2), jnp.float32)
    cxcy = jax.random.uniform(kr1, (B, N, 2), minval=0.25, maxval=0.75)
    wh = jax.random.uniform(kr2, (B, N, 2), minval=0.1, maxval=0.3)
    ref_windows = jnp.concatenate([cxcy, wh], axis=-1)      # (B, N, 4) cx,cy,w,h
    memory_mask = None                                       # all positions valid

    out, roi = box_transformer_decoder_layer(
        params, tgt, query_pos, memory, level_shapes,
        memory_mask, level_starts, memory_valid_ratios, ref_windows,
        nhead=NHEAD, kernel_size=KSZ)

    jax.block_until_ready(out)
    assert out.shape == (B, N, DEC_DIM) and roi is None
    assert bool(jnp.all(jnp.isfinite(out)))
    print("KERNEL_OK")
</pallas_src>

<mosaic_0001>
module attributes {stable_mosaic.version = 11 : i64} {
  func.func @_value_proj_kernel(%arg0: i32, %arg1: i32, %arg2: memref<1x80x32xbf16, #tpu.memory_space<vmem>>, %arg3: memref<32x32xbf16, #tpu.memory_space<vmem>>, %arg4: memref<1x32xf32, #tpu.memory_space<vmem>>, %arg5: memref<1x80x32xbf16, #tpu.memory_space<vmem>>) attributes {dimension_semantics = [#tpu.dimension_semantics<parallel>, #tpu.dimension_semantics<parallel>], iteration_bounds = array<i64: 2, 1>, scalar_prefetch = 0 : i64, scratch_operands = 0 : i64, tpu.core_type = #tpu.core_type<tc>, window_params = [{transform_indices = @transform_0, window_bounds = array<i64: 1, 80, 32>}, {pipeline_mode = #tpu.pipeline_mode<synchronous>, transform_indices = @transform_1, window_bounds = array<i64: 32, 32>}, {pipeline_mode = #tpu.pipeline_mode<synchronous>, transform_indices = @transform_2, window_bounds = array<i64: 1, 32>}, {transform_indices = @transform_3, window_bounds = array<i64: 1, 80, 32>}]} {
    %c0 = arith.constant 0 : index
    %c0_0 = arith.constant 0 : index
    %c0_1 = arith.constant 0 : index
    %0 = vector.load %arg2[%c0, %c0_0, %c0_1] : memref<1x80x32xbf16, #tpu.memory_space<vmem>>, vector<1x80x32xbf16>
    %1 = vector.shape_cast %0 : vector<1x80x32xbf16> to vector<80x32xbf16>
    %c0_2 = arith.constant 0 : index
    %c0_3 = arith.constant 0 : index
    %2 = vector.load %arg3[%c0_2, %c0_3] : memref<32x32xbf16, #tpu.memory_space<vmem>>, vector<32x32xbf16>
    %cst = arith.constant dense<0.000000e+00> : vector<80x32xf32>
    %3 = tpu.matmul %1, %2, %cst {dimension_numbers = #tpu.dot_dimension_numbers<[1], [0], [0], [1], [0, 0, 1, 1], [], []>} : vector<80x32xbf16>, vector<32x32xbf16>, vector<80x32xf32> -> vector<80x32xf32>
    %c0_4 = arith.constant 0 : index
    %c0_5 = arith.constant 0 : index
    %4 = vector.load %arg4[%c0_4, %c0_5] : memref<1x32xf32, #tpu.memory_space<vmem>>, vector<1x32xf32>
    %5 = vector.broadcast %4 : vector<1x32xf32> to vector<80x32xf32>
    %6 = arith.addf %3, %5 : vector<80x32xf32>
    %7 = arith.truncf %6 : vector<80x32xf32> to vector<80x32xbf16>
    %c0_6 = arith.constant 0 : index
    %c0_7 = arith.constant 0 : index
    %c0_8 = arith.constant 0 : index
    %8 = vector.load %arg5[%c0_6, %c0_7, %c0_8] : memref<1x80x32xbf16, #tpu.memory_space<vmem>>, vector<1x80x32xbf16>
    %9 = vector.shape_cast %8 : vector<1x80x32xbf16> to vector<80x32xbf16>
    %10 = vector.shape_cast %7 : vector<80x32xbf16> to vector<1x80x32xbf16>
    tpu.vector_store %arg5[%c0_6, %c0_7, %c0_8], %10 {strides = array<i32>} : memref<1x80x32xbf16, #tpu.memory_space<vmem>>, vector<1x80x32xbf16>,
    return
  }
  func.func @transform_0(%arg0: i32, %arg1: i32) -> (i32, i32, i32) {
    %c0_i32 = arith.constant 0 : i32
    %c0_i32_0 = arith.constant 0 : i32
    return %arg0, %arg1, %c0_i32 : i32, i32, i32
  }
  func.func @transform_1(%arg0: i32, %arg1: i32) -> (i32, i32) {
    %c0_i32 = arith.constant 0 : i32
    %c0_i32_0 = arith.constant 0 : i32
    %c0_i32_1 = arith.constant 0 : i32
    return %c0_i32, %c0_i32_0 : i32, i32
  }
  func.func @transform_2(%arg0: i32, %arg1: i32) -> (i32, i32) {
    %c0_i32 = arith.constant 0 : i32
    %c0_i32_0 = arith.constant 0 : i32
    %c0_i32_1 = arith.constant 0 : i32
    return %c0_i32, %c0_i32_0 : i32, i32
  }
  func.func @transform_3(%arg0: i32, %arg1: i32) -> (i32, i32, i32) {
    %c0_i32 = arith.constant 0 : i32
    %c0_i32_0 = arith.constant 0 : i32
    return %arg0, %arg1, %c0_i32 : i32, i32, i32
  }
}

</mosaic_0001>

<llo_original>
// kernel: tpu_custom_call.1
$region0: #{tpu_custom_call.1}
  #allocation0 [shape = 'u32[]', space=smem, size = 0x4, offset = 0x4, fixed_abs, tag = 'smem constant byte address 0x4 - core index']
  #allocation1 [shape = 'u32[144,128]{1,0:T(1,128)}', space=vmem, size = 0x12000, scoped, tag = 'internal scratch']
  %s0 = inlined_call_operand.vmem [shape: bf16[2,80,32], index: 0, kind: input, shape index: {}]
  %s1 = inlined_call_operand.vmem [shape: bf16[32,32], index: 1, kind: input, shape index: {}]
  %s2 = inlined_call_operand.vmem [shape: f32[1,32], index: 2, kind: input, shape index: {}]
  %s3 = inlined_call_operand.vmem [shape: bf16[2,80,32], index: 3, kind: output, shape index: {}]
  %s4 = sld [smem:[#allocation0]]
  $region45: #{tpu_custom_call.1} parent=0
    _
  %s6 = ssub.s32 1, %s4
  %s7 = scalar_select 0, %s6, %s4
  loop: start=0, step=1, limit=4
  $region2: #{tpu_custom_call.1} parent=0 // loop_pre_header
    _
  $region3: #{tpu_custom_call.1} parent=0 // loop_header
    %s9 = sphi 0, %s13
    %p10 = scmp.ge.s32.totalorder %s9, 4
    %s16 = sphi 0, %s28
    %s17 = sphi 0, %s24
    %s18 = sphi 0, %s16
    %s19 = sphi 0, %s17
    %s20 = sphi 0, %s18
    %s21 = sphi 0, %s19
    %s33 = sphi 0, %s35
    %s36 = sphi 0, %s33
    %s37 = sphi 0, %s36
    %s53 = sphi 0, %s37
    %s57 = sphi 0, %s57
    %s59 = sphi 0, %s57
    %s60 = sphi 0, %s59
    %s74 = sphi 0, %s60
    %s78 = sphi 0, %s78
    %s80 = sphi 0, %s78
    %s81 = sphi 0, %s80
    %s95 = sphi 0, %s81
    %s103 = sphi 0, %s105
    %s106 = sphi 0, %s103
    %s107 = sphi 0, %s106
    %s123 = sphi 0, %s107
  $region4: #{tpu_custom_call.1} parent=0 // loop_header_branch
    %12 = sbr.rel (%p10) target = $region8
  $region5: #{tpu_custom_call.1} parent=0 // loop_body
    %s14 = ssub.s32 %s9, 1
    %s15 = ssub.s32 %s9, 2
    %s22 = sadd.s32 1, %s17
    %p23 = scmp.ge.s32.totalorder %s22, 1
    %s24 = scalar_select %p23, 0, %s22
    %s25 = sadd.s32 1, %s16
    %s26 = scalar_select %p23, %s25, %s16
    %p27 = scmp.ge.s32.totalorder %s26, 2
    %s28 = scalar_select %p27, 0, %s26
    %s29 = ssub.s32 %s16, %s28
    %s30 = ssub.s32 %s17, %s24
    %s31 = sor.u32 %s29, %s30
    %p32 = scmp.eq.s32.totalorder %s31, 0
    %s34 = sadd.s32 %s33, 1
    %s35 = scalar_select %p32, %s33, %s34
    %p38 = pneg %p32
    %p39 = scmp.eq.s32.totalorder %s9, 1
    %p40 = por %p38, %p39
    %p41 = scmp.ne.s32.totalorder %s33, %s36
    %p42 = scmp.eq.s32.totalorder %s9, 0
    %p43 = por %p41, %p42
    %p44 = scmp.ne.s32.totalorder %s33, %s36
    %p45 = scmp.eq.s32.totalorder %s14, 1
    %p46 = por %p44, %p45
    %p47 = scmp.ne.s32.totalorder %s36, %s37
    %p48 = scmp.eq.s32.totalorder %s14, 0
    %p49 = por %p47, %p48
    %p50 = scmp.ne.s32.totalorder %s36, %s37
    %p51 = scmp.eq.s32.totalorder %s15, 1
    %p52 = por %p50, %p51
    %p54 = scmp.ne.s32.totalorder %s37, %s53
    %p55 = scmp.eq.s32.totalorder %s15, 0
    %p56 = por %p54, %p55
    %s58 = sadd.s32 %s57, 1
    %p61 = scmp.eq.s32.totalorder %s9, 1
    %p62 = scmp.ne.s32.totalorder %s57, %s59
    %p63 = scmp.eq.s32.totalorder %s9, 0
    %p64 = por %p62, %p63
    %p65 = scmp.ne.s32.totalorder %s57, %s59
    %p66 = scmp.eq.s32.totalorder %s14, 1
    %p67 = por %p65, %p66
    %p68 = scmp.ne.s32.totalorder %s59, %s60
    %p69 = scmp.eq.s32.totalorder %s14, 0
    %p70 = por %p68, %p69
    %p71 = scmp.ne.s32.totalorder %s59, %s60
    %p72 = scmp.eq.s32.totalorder %s15, 1
    %p73 = por %p71, %p72
    %p75 = scmp.ne.s32.totalorder %s60, %s74
    %p76 = scmp.eq.s32.totalorder %s15, 0
    %p77 = por %p75, %p76
    %s79 = sadd.s32 %s78, 1
    %p82 = scmp.eq.s32.totalorder %s9, 1
    %p83 = scmp.ne.s32.totalorder %s78, %s80
    %p84 = scmp.eq.s32.totalorder %s9, 0
    %p85 = por %p83, %p84
    %p86 = scmp.ne.s32.totalorder %s78, %s80
    %p87 = scmp.eq.s32.totalorder %s14, 1
    %p88 = por %p86, %p87
    %p89 = scmp.ne.s32.totalorder %s80, %s81
    %p90 = scmp.eq.s32.totalorder %s14, 0
    %p91 = por %p89, %p90
    %p92 = scmp.ne.s32.totalorder %s80, %s81
    %p93 = scmp.eq.s32.totalorder %s15, 1
    %p94 = por %p92, %p93
    %p96 = scmp.ne.s32.totalorder %s81, %s95
    %p97 = scmp.eq.s32.totalorder %s15, 0
    %p98 = por %p96, %p97
    %s99 = ssub.s32 %s16, %s28
    %s100 = ssub.s32 %s17, %s24
    %s101 = sor.u32 %s99, %s100
    %p102 = scmp.eq.s32.totalorder %s101, 0
    %s104 = sadd.s32 %s103, 1
    %s105 = scalar_select %p102, %s103, %s104
    %p108 = pneg %p102
    %p109 = scmp.eq.s32.totalorder %s9, 1
    %p110 = por %p108, %p109
    %p111 = scmp.ne.s32.totalorder %s103, %s106
    %p112 = scmp.eq.s32.totalorder %s9, 0
    %p113 = por %p111, %p112
    %p114 = scmp.ne.s32.totalorder %s103, %s106
    %p115 = scmp.eq.s32.totalorder %s14, 1
    %p116 = por %p114, %p115
    %p117 = scmp.ne.s32.totalorder %s106, %s107
    %p118 = scmp.eq.s32.totalorder %s14, 0
    %p119 = por %p117, %p118
    %p120 = scmp.ne.s32.totalorder %s106, %s107
    %p121 = scmp.eq.s32.totalorder %s15, 1
    %p122 = por %p120, %p121
    %p124 = scmp.ne.s32.totalorder %s107, %s123
    %p125 = scmp.eq.s32.totalorder %s15, 0
    %p126 = por %p124, %p125
    %p127 = scmp.le.s32.totalorder 1, %s9
    %p128 = scmp.lt.s32.totalorder %s9, 3
    %p129 = pnand %p127, %p128
    %p130 = pneg %p129
    // Predicated region
    $region9: #{tpu_custom_call.1} parent=5 // pred_check
      _
    $region10: #{tpu_custom_call.1} parent=5 // pred_check_branch
      %132 = sbr.rel (%p129) target = $region12
    $region11: #{tpu_custom_call.1} parent=5 // pred_region
      %s133 = ssub.s32 %s9, 1
      // Predicated region
      $region13: #{tpu_custom_call.1} parent=11 // pred_check
        %p134 = pneg %p70
      $region14: #{tpu_custom_call.1} parent=11 // pred_check_branch
        %136 = sbr.rel (%p134) target = $region16
      $region15: #{tpu_custom_call.1} parent=11 // pred_region
        _
      $region16: #{tpu_custom_call.1} parent=11 // pred_fallthru
        _
      // Predicated region
      $region17: #{tpu_custom_call.1} parent=11 // pred_check
        %p137 = pneg %p91
      $region18: #{tpu_custom_call.1} parent=11 // pred_check_branch
        %139 = sbr.rel (%p137) target = $region20
      $region19: #{tpu_custom_call.1} parent=11 // pred_region
        _
      $region20: #{tpu_custom_call.1} parent=11 // pred_fallthru
        _
    $region12: #{tpu_custom_call.1} parent=5 // pred_fallthru
      _
    %p140 = scmp.lt.s32.totalorder %s9, 2
    // Predicated region
    $region21: #{tpu_custom_call.1} parent=5 // pred_check
      %p141 = pneg %p140
    $region22: #{tpu_custom_call.1} parent=5 // pred_check_branch
      %143 = sbr.rel (%p141) target = $region24
    $region23: #{tpu_custom_call.1} parent=5 // pred_region
      // Predicated region
      $region25: #{tpu_custom_call.1} parent=23 // pred_check
        %p144 = pneg %p43
      $region26: #{tpu_custom_call.1} parent=23 // pred_check_branch
        %146 = sbr.rel (%p144) target = $region28
      $region27: #{tpu_custom_call.1} parent=23 // pred_region
        %s147 = smul.u32 10, %s17
        %p148 = scmp.lt.s32.totalorder %s16, 1
        %s149 = scalar_select %p148, %s16, 1
        %p150 = scmp.lt.s32.totalorder %s147, 9
        %s151 = scalar_select %p150, %s147, 9
        %s152 = smul.addr %s149, 10
        %s153 = sadd.s32 %s151, %s152
        %s154 = smul.addr %s153, 4
        %s155 = scalar_lea.vmem %s0, %s154
        %s156 = smul.u32 10, %s17
      $region28: #{tpu_custom_call.1} parent=23 // pred_fallthru
        _
    $region24: #{tpu_custom_call.1} parent=5 // pred_fallthru
      _
    %p157 = scmp.le.s32.totalorder 1, %s9
    %p158 = scmp.lt.s32.totalorder %s9, 3
    %p159 = pnand %p157, %p158
    %p160 = pneg %p159
    // Predicated region
    $region29: #{tpu_custom_call.1} parent=5 // pred_check
      _
    $region30: #{tpu_custom_call.1} parent=5 // pred_check_branch
      %162 = sbr.rel (%p159) target = $region32
    $region31: #{tpu_custom_call.1} parent=5 // pred_region
      %s163 = ssub.s32 %s9, 1
      %s164 = smul.u32 10, %s19
      %p165 = scmp.lt.s32.totalorder %s18, 1
      %s166 = scalar_select %p165, %s18, 1
      %p167 = scmp.lt.s32.totalorder %s164, 9
      %s168 = scalar_select %p167, %s164, 9
      %s169 = smul.addr %s166, 10
      %s170 = sadd.s32 %s168, %s169
      %s171 = smul.addr %s170, 4
      %s172 = scalar_lea.vmem %s0, %s171
      %p173 = pneg %p49
      %p174 = pneg %p46
      %p175 = pneg %p70
      %p176 = pneg %p67
      %p177 = pneg %p91
      %p178 = pneg %p88
      %p179 = pneg %p119
      %p180 = pneg %p116
      %s181 = smul.u32 10, %s19
      %p182 = scmp.lt.s32.totalorder %s18, 1
      %s183 = scalar_select %p182, %s18, 1
      %p184 = scmp.lt.s32.totalorder %s181, 9
      %s185 = scalar_select %p184, %s181, 9
      %s186 = smul.addr %s183, 10
      %s187 = sadd.s32 %s185, %s186
      %s188 = smul.addr %s187, 4
      %s189 = scalar_lea.vmem %s3, %s188
      %s190 = smul.u32 10, %s19
      %p191 = scmp.lt.s32.totalorder %s18, 1
      %s192 = scalar_select %p191, %s18, 1
      %p193 = scmp.lt.s32.totalorder %s190, 9
      %s194 = scalar_select %p193, %s190, 9
      %s195 = smul.addr %s192, 10
      %s196 = sadd.s32 %s194, %s195
      %s197 = smul.addr %s196, 4
      %s198 = scalar_lea.vmem %s0, %s197
      %s199 = smul.u32 10, %s19
      %s200 = smul.u32 10, %s19
      %p201 = scmp.lt.s32.totalorder %s18, 1
      %s202 = scalar_select %p201, %s18, 1
      %p203 = scmp.lt.s32.totalorder %s200, 9
      %s204 = scalar_select %p203, %s200, 9
      %s205 = smul.addr %s202, 10
      %s206 = sadd.s32 %s204, %s205
      %s207 = smul.addr %s206, 4
      %s208 = scalar_lea.vmem %s3, %s207
      %s209 = smul.u32 10, %s19
      %v211 = vld [vmem:[%s198] sm:$0xf]
      %v212 = vld [vmem:[%s198 + $0x4] sm:$0xf]
      %v213 = vld [vmem:[%s198 + $0x8] sm:$0xf]
      %v214 = vld [vmem:[%s198 + $0xc] sm:$0xf]
      %v215 = vld [vmem:[%s198 + $0x10] sm:$0xf]
      %v216 = vld [vmem:[%s198 + $0x14] sm:$0xf]
      %v217 = vld [vmem:[%s198 + $0x18] sm:$0xf]
      %v218 = vld [vmem:[%s198 + $0x1c] sm:$0xf]
      %v219 = vld [vmem:[%s198 + $0x20] sm:$0xf]
      %v220 = vld [vmem:[%s198 + $0x24] sm:$0xf]
      %v221 = vld [vmem:[%s1] sm:$0xf]
      %v222 = vld [vmem:[%s1 + $0x4] sm:$0xf]
      %v223 = vld [vmem:[%s1 + $0x8] sm:$0xf]
      %v224 = vld [vmem:[%s1 + $0xc] sm:$0xf]
      %v225 = vld [vmem:[%s2] sm:$0x1]
      %v227 = vlaneseq
      %v228 = vshrl.u32 %v227, 7
      %v229 = vsub.s32 0, %v228
      %v230 = vrot.slane %v225, %v229
      %v242 = vunpack.c.l.b16 %v211
      %v243 = vunpack.c.l.b16 %v212
      %v244 = vunpack.c.l.b16 %v213
      %v245 = vunpack.c.l.b16 %v214
      %v246 = vunpack.c.l.b16 %v215
      %v247 = vunpack.c.l.b16 %v216
      %v248 = vunpack.c.l.b16 %v217
      %v249 = vunpack.c.l.b16 %v218
      %v250 = vunpack.c.l.b16 %v219
      %v251 = vunpack.c.l.b16 %v220
      %v252 = vpack.c.b16 %v243, %v242
      %v253 = vpack.c.b16 %v245, %v244
      %v254 = vpack.c.b16 %v247, %v246
      %v255 = vpack.c.b16 %v249, %v248
      %v256 = vpack.c.b16 %v251, %v250
      %v261 = vunpack.c.l.b16 %v221
      %v262 = vunpack.c.l.b16 %v222
      %v263 = vunpack.c.l.b16 %v223
      %v264 = vunpack.c.l.b16 %v224
      %v265 = vpack.c.b16 %v262, %v261
      %v266 = vpack.c.b16 %v264, %v263
      %vm269 = vcmask 261120
      %v271 = vsel %vm269, %v252, 0
      %v274 = vsel %vm269, %v253, 0
      %v277 = vsel %vm269, %v254, 0
      %v280 = vsel %vm269, %v255, 0
      %v283 = vsel %vm269, %v256, 0
      %285 = vmatprep.subr.bf16.mxu0 0
      %286 = vmatpush1.bf16.msra.mxu0 %v265
      %287 = vmatprep.subr.bf16.mxu0 0
      %288 = vmatpush1.bf16.msra.mxu0 %v266
      %289 = vmatprep.subr.bf16.mxu0 0
      %290 = vmatpush1.bf16.msra.mxu0 0
      %291 = vmatprep.subr.bf16.mxu0 0
      %292 = vmatpush1.bf16.msra.mxu0 0
      %293 = vmatprep.subr.bf16.mxu0 0
      %294 = vmatpush1.bf16.msra.mxu0 0
      %295 = vmatprep.subr.bf16.mxu0 0
      %296 = vmatpush1.bf16.msra.mxu0 0
      %297 = vmatprep.subr.bf16.mxu0 0
      %298 = vmatpush1.bf16.msra.mxu0 0
      %299 = vmatprep.subr.bf16.mxu0 0
      %300 = vmatpush1.bf16.msra.mxu0 0
      %301 = vmatprep.subr.bf16.mxu0 0
      %302 = vmatpush1.bf16.msra.mxu0 0
      %303 = vmatprep.subr.bf16.mxu0 0
      %304 = vmatpush1.bf16.msra.mxu0 0
      %305 = vmatprep.subr.bf16.mxu0 0
      %306 = vmatpush1.bf16.msra.mxu0 0
      %307 = vmatprep.subr.bf16.mxu0 0
      %308 = vmatpush1.bf16.msra.mxu0 0
      %309 = vmatprep.subr.bf16.mxu0 0
      %310 = vmatpush1.bf16.msra.mxu0 0
      %311 = vmatprep.subr.bf16.mxu0 0
      %312 = vmatpush1.bf16.msra.mxu0 0
      %313 = vmatprep.subr.bf16.mxu0 0
      %314 = vmatpush1.bf16.msra.mxu0 0
      %315 = vmatprep.subr.bf16.mxu0 0
      %316 = vmatpush1.bf16.msra.mxu0 0
      %317 = vmatprep.mubr.bf16.mxu0 0
      %318 = vmatmul.mubr.bf16.gmra.mrb[0].mxu0 %v271
      %v319 = vpop.f32.mrb[0].mxu0
      %v320 = vadd.f32 %v230, %v319
      %v321 = vpop.f32.mrb[0].mxu0
      %v322 = vpop.f32.mrb[0].mxu0
      %v323 = vadd.f32 %v230, %v322
      %v324 = vpop.f32.mrb[0].mxu0
      %325 = vmatprep.mubr.bf16.mxu0 0
      %326 = vmatmul.mubr.bf16.gmra.mrb[0].mxu0 %v274
      %v327 = vpop.f32.mrb[0].mxu0
      %v328 = vadd.f32 %v230, %v327
      %v329 = vpop.f32.mrb[0].mxu0
      %v330 = vpop.f32.mrb[0].mxu0
      %v331 = vadd.f32 %v230, %v330
      %v332 = vpop.f32.mrb[0].mxu0
      %333 = vmatprep.mubr.bf16.mxu0 0
      %334 = vmatmul.mubr.bf16.gmra.mrb[0].mxu0 %v277
      %v335 = vpop.f32.mrb[0].mxu0
      %v336 = vadd.f32 %v230, %v335
      %v337 = vpop.f32.mrb[0].mxu0
      %v338 = vpop.f32.mrb[0].mxu0
      %v339 = vadd.f32 %v230, %v338
      %v340 = vpop.f32.mrb[0].mxu0
      %341 = vmatprep.mubr.bf16.mxu0 0
      %342 = vmatmul.mubr.bf16.gmra.mrb[0].mxu0 %v280
      %v343 = vpop.f32.mrb[0].mxu0
      %v344 = vadd.f32 %v230, %v343
      %v345 = vpop.f32.mrb[0].mxu0
      %v346 = vpop.f32.mrb[0].mxu0
      %v347 = vadd.f32 %v230, %v346
      %v348 = vpop.f32.mrb[0].mxu0
      %349 = vmatprep.mubr.bf16.mxu0 0
      %350 = vmatmul.mubr.bf16.gmra.mrb[0].mxu0 %v283
      %v351 = vpop.f32.mrb[0].mxu0
      %v352 = vadd.f32 %v230, %v351
      %v353 = vpop.f32.mrb[0].mxu0
      %v354 = vpop.f32.mrb[0].mxu0
      %v355 = vadd.f32 %v230, %v354
      %v356 = vpop.f32.mrb[0].mxu0
      %357 = vdwg.mxu0
      %v358 = vpack.c.bf16 %v323, %v320
      %v359 = vpack.c.bf16 %v331, %v328
      %v360 = vpack.c.bf16 %v339, %v336
      %v361 = vpack.c.bf16 %v347, %v344
      %v362 = vpack.c.bf16 %v355, %v352
      %v368 = vunpack.c.l.b16 %v358
      %v369 = vunpack.c.h.b16 %v358
      %v370 = vunpack.c.l.b16 %v359
      %v371 = vunpack.c.h.b16 %v359
      %v372 = vunpack.c.l.b16 %v360
      %v373 = vunpack.c.h.b16 %v360
      %v374 = vunpack.c.l.b16 %v361
      %v375 = vunpack.c.h.b16 %v361
      %v376 = vunpack.c.l.b16 %v362
      %v377 = vunpack.c.h.b16 %v362
      %v378 = vpack.c.b16 %v368, %v368
      %v379 = vpack.c.b16 %v369, %v369
      %v380 = vpack.c.b16 %v370, %v370
      %v381 = vpack.c.b16 %v371, %v371
      %v382 = vpack.c.b16 %v372, %v372
      %v383 = vpack.c.b16 %v373, %v373
      %v384 = vpack.c.b16 %v374, %v374
      %v385 = vpack.c.b16 %v375, %v375
      %v386 = vpack.c.b16 %v376, %v376
      %v387 = vpack.c.b16 %v377, %v377
      %vm398 = vcmask 257024
      %399 = vst.msk [vmem:[%s208] sm:$0xf] %vm398, %v378
      %400 = vst.msk [vmem:[%s208 + $0x4] sm:$0xf] %vm398, %v379
      %401 = vst.msk [vmem:[%s208 + $0x8] sm:$0xf] %vm398, %v380
      %402 = vst.msk [vmem:[%s208 + $0xc] sm:$0xf] %vm398, %v381
      %403 = vst.msk [vmem:[%s208 + $0x10] sm:$0xf] %vm398, %v382
      %404 = vst.msk [vmem:[%s208 + $0x14] sm:$0xf] %vm398, %v383
      %405 = vst.msk [vmem:[%s208 + $0x18] sm:$0xf] %vm398, %v384
      %406 = vst.msk [vmem:[%s208 + $0x1c] sm:$0xf] %vm398, %v385
      %407 = vst.msk [vmem:[%s208 + $0x20] sm:$0xf] %vm398, %v386
      %408 = vst.msk [vmem:[%s208 + $0x24] sm:$0xf] %vm398, %v387
      %s409 = smul.u32 10, %s19
      %p410 = scmp.lt.s32.totalorder %s18, 1
      %s411 = scalar_select %p410, %s18, 1
      %p412 = scmp.lt.s32.totalorder %s409, 9
      %s413 = scalar_select %p412, %s409, 9
      %s414 = smul.addr %s411, 10
      %s415 = sadd.s32 %s413, %s414
      %s416 = smul.addr %s415, 4
      %s417 = scalar_lea.vmem %s3, %s416
      // Predicated region
      $region33: #{tpu_custom_call.1} parent=31 // pred_check
        %p418 = pneg %p116
      $region34: #{tpu_custom_call.1} parent=31 // pred_check_branch
        %420 = sbr.rel (%p418) target = $region36
      $region35: #{tpu_custom_call.1} parent=31 // pred_region
        %s421 = smul.u32 10, %s19
      $region36: #{tpu_custom_call.1} parent=31 // pred_fallthru
        _
    $region32: #{tpu_custom_call.1} parent=5 // pred_fallthru
      _
    %p422 = scmp.le.s32.totalorder 2, %s9
    // Predicated region
    $region37: #{tpu_custom_call.1} parent=5 // pred_check
      %p423 = pneg %p422
    $region38: #{tpu_custom_call.1} parent=5 // pred_check_branch
      %425 = sbr.rel (%p423) target = $region40
    $region39: #{tpu_custom_call.1} parent=5 // pred_region
      %s426 = ssub.s32 %s9, 2
      // Predicated region
      $region41: #{tpu_custom_call.1} parent=39 // pred_check
        %p427 = pneg %p122
      $region42: #{tpu_custom_call.1} parent=39 // pred_check_branch
        %429 = sbr.rel (%p427) target = $region44
      $region43: #{tpu_custom_call.1} parent=39 // pred_region
        %s430 = smul.u32 10, %s21
        %p431 = scmp.lt.s32.totalorder %s20, 1
        %s432 = scalar_select %p431, %s20, 1
        %p433 = scmp.lt.s32.totalorder %s430, 9
        %s434 = scalar_select %p433, %s430, 9
        %s435 = smul.addr %s432, 10
        %s436 = sadd.s32 %s434, %s435
        %s437 = smul.addr %s436, 4
        %s438 = scalar_lea.vmem %s3, %s437
      $region44: #{tpu_custom_call.1} parent=39 // pred_fallthru
        _
    $region40: #{tpu_custom_call.1} parent=5 // pred_fallthru
      _
  $region6: #{tpu_custom_call.1} parent=0 // loop_footer
    %s13 = sadd.s32 1, %s9
  $region7: #{tpu_custom_call.1} parent=0 // loop_footer_branch
    %8 = sbr.rel target = $region3
  $region8: #{tpu_custom_call.1} parent=0 // loop_exit
    _

</llo_original>
